<compile_context>
chip_gen: v5e
topology: v5e:2x2
jax: 0.10.0
libtpu: 0.0.40
codegen_flags: <defaults>
</compile_context>

<pallas_src>
import jax
import jax.numpy as jnp
from jax.experimental import pallas as pl
from jax.experimental.pallas import tpu as pltpu


def _logreg_kernel(x_ref, w_ref, b_ref, o_ref):
    # x_ref: (tile_b, F)   w_ref: (F, 1)   b_ref: (1, 1)   o_ref: (tile_b, 1)
    o_ref[...] = (
        jnp.dot(x_ref[...], w_ref[...], preferred_element_type=jnp.float32)
        + b_ref[...]
    ).astype(o_ref.dtype)


def _round_up(n, m):
    return ((n + m - 1) // m) * m


def _pick_tile_b(batch, feat, itemsize, requested):
    # Keep double-buffered x tiles (2 * tile_b * F * itemsize) well under the
    # v7x scoped-VMEM ceiling; multiple of 8 (f32 sublane); never larger than
    # the (padded) batch.
    budget = 8 * 1024 * 1024
    cap = max(8, budget // max(1, 2 * feat * itemsize))
    tile = min(requested, cap, _round_up(batch, 8))
    return max(8, (tile // 8) * 8)


def logistic_regression_forward(x, theta, *, tile_b=2048):
    """Pallas equivalent of LogisticRegressionModel.forward (theta = [w, b])."""
    B = x.shape[0]
    x2 = x.reshape(B, -1)                       # Flatten
    F = x2.shape[1]
    assert theta.shape == (F + 1,), (theta.shape, F)

    w = theta[:-1].reshape(F, 1).astype(x2.dtype)   # supplying bf16 x/theta halves HBM traffic
    b = theta[-1].reshape(1, 1).astype(jnp.float32)

    tile_b = _pick_tile_b(B, F, x2.dtype.itemsize, tile_b)
    B_pad = _round_up(B, tile_b)
    if B_pad != B:
        x2 = jnp.pad(x2, ((0, B_pad - B), (0, 0)))

    logits = pl.pallas_call(
        _logreg_kernel,
        out_shape=jax.ShapeDtypeStruct((B_pad, 1), jnp.float32),
        grid=(B_pad // tile_b,),
        in_specs=[
            pl.BlockSpec((tile_b, F), lambda i: (i, 0)),  # streamed batch tiles
            pl.BlockSpec((F, 1), lambda i: (0, 0)),       # weights stay resident
            pl.BlockSpec((1, 1), lambda i: (0, 0)),       # bias stays resident
        ],
        out_specs=pl.BlockSpec((tile_b, 1), lambda i: (i, 0)),
        compiler_params=pltpu.CompilerParams(
            dimension_semantics=("parallel",),
            vmem_limit_bytes=32 * 1024 * 1024,
        ),
    )(x2, w, b)

    logits = logits[:B]
    # torch.cat([zeros_like(logits), logits], -1): formed in the wrapper so the
    # kernel never stores (or computes) the constant-zero column; XLA fuses it.
    return jnp.concatenate([jnp.zeros_like(logits), logits], axis=-1)


if __name__ == "__main__":
    key = jax.random.PRNGKey(0)
    k_x, k_theta = jax.random.split(key, 2)

    # Small shapes consistent with the module: batch=64 inputs of shape (4, 8)
    # flattened to n_in=32 features; theta holds (w, b) like the PyTorch model.
    B, C, W = 64, 4, 8
    n_in = C * W
    x = jax.random.normal(k_x, (B, C, W), dtype=jnp.float32)
    theta = jax.random.normal(k_theta, (n_in + 1,), dtype=jnp.float32) * 0.1

    out = logistic_regression_forward(x, theta, tile_b=16)  # 4 grid steps
    out = jax.block_until_ready(out)

    # Plain-JAX reference of the PyTorch forward.
    x_flat = x.reshape(B, -1)
    logits_ref = x_flat @ theta[:-1][:, None] + theta[-1]
    ref = jnp.concatenate([jnp.zeros_like(logits_ref), logits_ref], axis=-1)

    assert out.shape == (B, 2)
    assert jnp.allclose(out[:, 0], 0.0)
    assert jnp.allclose(out, ref, atol=1e-4, rtol=1e-4), float(
        jnp.max(jnp.abs(out - ref))
    )
    print("KERNEL_OK")
</pallas_src>

<mosaic_0001>
module attributes {stable_mosaic.version = 11 : i64} {
  func.func @_logreg_kernel(%arg0: i32, %arg1: memref<16x32xf32, #tpu.memory_space<vmem>>, %arg2: memref<32x1xf32, #tpu.memory_space<vmem>>, %arg3: memref<1x1xf32, #tpu.memory_space<vmem>>, %arg4: memref<16x1xf32, #tpu.memory_space<vmem>>) attributes {dimension_semantics = [#tpu.dimension_semantics<parallel>], iteration_bounds = array<i64: 4>, scalar_prefetch = 0 : i64, scratch_operands = 0 : i64, tpu.core_type = #tpu.core_type<tc>, window_params = [{transform_indices = @transform_0, window_bounds = array<i64: 16, 32>}, {pipeline_mode = #tpu.pipeline_mode<synchronous>, transform_indices = @transform_1, window_bounds = array<i64: 32, 1>}, {pipeline_mode = #tpu.pipeline_mode<synchronous>, transform_indices = @transform_2, window_bounds = array<i64: 1, 1>}, {transform_indices = @transform_3, window_bounds = array<i64: 16, 1>}]} {
    %c0 = arith.constant 0 : index
    %c0_0 = arith.constant 0 : index
    %0 = vector.load %arg1[%c0, %c0_0] : memref<16x32xf32, #tpu.memory_space<vmem>>, vector<16x32xf32>
    %c0_1 = arith.constant 0 : index
    %c0_2 = arith.constant 0 : index
    %1 = vector.load %arg2[%c0_1, %c0_2] : memref<32x1xf32, #tpu.memory_space<vmem>>, vector<32x1xf32>
    %cst = arith.constant dense<0.000000e+00> : vector<16x1xf32>
    %2 = tpu.matmul %0, %1, %cst {dimension_numbers = #tpu.dot_dimension_numbers<[1], [0], [0], [1], [0, 0, 1, 1], [], []>} : vector<16x32xf32>, vector<32x1xf32>, vector<16x1xf32> -> vector<16x1xf32>
    %c0_3 = arith.constant 0 : index
    %c0_4 = arith.constant 0 : index
    %3 = vector.load %arg3[%c0_3, %c0_4] : memref<1x1xf32, #tpu.memory_space<vmem>>, vector<1x1xf32>
    %4 = vector.broadcast %3 : vector<1x1xf32> to vector<16x1xf32>
    %5 = arith.addf %2, %4 : vector<16x1xf32>
    %c0_5 = arith.constant 0 : index
    %c0_6 = arith.constant 0 : index
    %6 = vector.load %arg4[%c0_5, %c0_6] : memref<16x1xf32, #tpu.memory_space<vmem>>, vector<16x1xf32>
    tpu.vector_store %arg4[%c0_5, %c0_6], %5 {strides = array<i32>} : memref<16x1xf32, #tpu.memory_space<vmem>>, vector<16x1xf32>,
    return
  }
  func.func @transform_0(%arg0: i32) -> (i32, i32) {
    %c0_i32 = arith.constant 0 : i32
    %c0_i32_0 = arith.constant 0 : i32
    return %arg0, %c0_i32 : i32, i32
  }
  func.func @transform_1(%arg0: i32) -> (i32, i32) {
    %c0_i32 = arith.constant 0 : i32
    %c0_i32_0 = arith.constant 0 : i32
    %c0_i32_1 = arith.constant 0 : i32
    return %c0_i32, %c0_i32_0 : i32, i32
  }
  func.func @transform_2(%arg0: i32) -> (i32, i32) {
    %c0_i32 = arith.constant 0 : i32
    %c0_i32_0 = arith.constant 0 : i32
    %c0_i32_1 = arith.constant 0 : i32
    return %c0_i32, %c0_i32_0 : i32, i32
  }
  func.func @transform_3(%arg0: i32) -> (i32, i32) {
    %c0_i32 = arith.constant 0 : i32
    %c0_i32_0 = arith.constant 0 : i32
    return %arg0, %c0_i32 : i32, i32
  }
}

</mosaic_0001>

<llo_original>
// kernel: tpu_custom_call.1
$region0: #{tpu_custom_call.1}
  #allocation0 [shape = 'u32[]', space=smem, size = 0x4, offset = 0x4, fixed_abs, tag = 'smem constant byte address 0x4 - core index']
  #allocation1 [shape = 'u32[72,128]{1,0:T(1,128)}', space=vmem, size = 0x9000, scoped, tag = 'internal scratch']
  #allocation2 [shape = 'f32[1,1]{1,0:T(1,128)S(1)}', space=vmem, size = 0x200, scoped, tag = 'scoped memory for tpu_custom_call.1']
  %s0 = inlined_call_operand.vmem [shape: f32[64,32], index: 0, kind: input, shape index: {}]
  %s1 = inlined_call_operand.vmem [shape: f32[32,1], index: 1, kind: input, shape index: {}]
  %s2 = inlined_call_operand.<no memory space> [shape: f32[1,1], index: 2, kind: input, shape index: {}]
  %s3 = inlined_call_operand.vmem [shape: f32[64,1], index: 3, kind: output, shape index: {}]
  %s4 = sld [smem:[#allocation0]]
  $region45: #{tpu_custom_call.1} parent=0
    _
  %s6 = ssub.s32 1, %s4
  %s7 = scalar_select 0, %s6, %s4
  %v8 = vstv %s2
  %9 = vst [vmem:[#allocation2] sm:$0x1] %v8
  loop: start=0, step=1, limit=6
  $region2: #{tpu_custom_call.1} parent=0 // loop_pre_header
    _
  $region3: #{tpu_custom_call.1} parent=0 // loop_header
    %s11 = sphi 0, %s15
    %p12 = scmp.ge.s32.totalorder %s11, 6
    %s21 = sphi 0, %s23
    %s24 = sphi 0, %s21
    %s25 = sphi 0, %s24
    %s41 = sphi 0, %s25
    %s45 = sphi 0, %s45
    %s47 = sphi 0, %s45
    %s48 = sphi 0, %s47
    %s62 = sphi 0, %s48
    %s66 = sphi 0, %s66
    %s68 = sphi 0, %s66
    %s69 = sphi 0, %s68
    %s83 = sphi 0, %s69
    %s89 = sphi 0, %s91
    %s92 = sphi 0, %s89
    %s93 = sphi 0, %s92
    %s109 = sphi 0, %s93
  $region4: #{tpu_custom_call.1} parent=0 // loop_header_branch
    %14 = sbr.rel (%p12) target = $region8
  $region5: #{tpu_custom_call.1} parent=0 // loop_body
    %s16 = ssub.s32 %s11, 1
    %s17 = ssub.s32 %s11, 2
    %s18 = sadd.s32 %s11, 1
    %s19 = ssub.s32 %s11, %s18
    %p20 = scmp.eq.s32.totalorder %s19, 0
    %s22 = sadd.s32 %s21, 1
    %s23 = scalar_select %p20, %s21, %s22
    %p26 = pneg %p20
    %p27 = scmp.eq.s32.totalorder %s11, 3
    %p28 = por %p26, %p27
    %p29 = scmp.ne.s32.totalorder %s21, %s24
    %p30 = scmp.eq.s32.totalorder %s11, 0
    %p31 = por %p29, %p30
    %p32 = scmp.ne.s32.totalorder %s21, %s24
    %p33 = scmp.eq.s32.totalorder %s16, 3
    %p34 = por %p32, %p33
    %p35 = scmp.ne.s32.totalorder %s24, %s25
    %p36 = scmp.eq.s32.totalorder %s16, 0
    %p37 = por %p35, %p36
    %p38 = scmp.ne.s32.totalorder %s24, %s25
    %p39 = scmp.eq.s32.totalorder %s17, 3
    %p40 = por %p38, %p39
    %p42 = scmp.ne.s32.totalorder %s25, %s41
    %p43 = scmp.eq.s32.totalorder %s17, 0
    %p44 = por %p42, %p43
    %s46 = sadd.s32 %s45, 1
    %p49 = scmp.eq.s32.totalorder %s11, 3
    %p50 = scmp.ne.s32.totalorder %s45, %s47
    %p51 = scmp.eq.s32.totalorder %s11, 0
    %p52 = por %p50, %p51
    %p53 = scmp.ne.s32.totalorder %s45, %s47
    %p54 = scmp.eq.s32.totalorder %s16, 3
    %p55 = por %p53, %p54
    %p56 = scmp.ne.s32.totalorder %s47, %s48
    %p57 = scmp.eq.s32.totalorder %s16, 0
    %p58 = por %p56, %p57
    %p59 = scmp.ne.s32.totalorder %s47, %s48
    %p60 = scmp.eq.s32.totalorder %s17, 3
    %p61 = por %p59, %p60
    %p63 = scmp.ne.s32.totalorder %s48, %s62
    %p64 = scmp.eq.s32.totalorder %s17, 0
    %p65 = por %p63, %p64
    %s67 = sadd.s32 %s66, 1
    %p70 = scmp.eq.s32.totalorder %s11, 3
    %p71 = scmp.ne.s32.totalorder %s66, %s68
    %p72 = scmp.eq.s32.totalorder %s11, 0
    %p73 = por %p71, %p72
    %p74 = scmp.ne.s32.totalorder %s66, %s68
    %p75 = scmp.eq.s32.totalorder %s16, 3
    %p76 = por %p74, %p75
    %p77 = scmp.ne.s32.totalorder %s68, %s69
    %p78 = scmp.eq.s32.totalorder %s16, 0
    %p79 = por %p77, %p78
    %p80 = scmp.ne.s32.totalorder %s68, %s69
    %p81 = scmp.eq.s32.totalorder %s17, 3
    %p82 = por %p80, %p81
    %p84 = scmp.ne.s32.totalorder %s69, %s83
    %p85 = scmp.eq.s32.totalorder %s17, 0
    %p86 = por %p84, %p85
    %s87 = ssub.s32 %s11, %s18
    %p88 = scmp.eq.s32.totalorder %s87, 0
    %s90 = sadd.s32 %s89, 1
    %s91 = scalar_select %p88, %s89, %s90
    %p94 = pneg %p88
    %p95 = scmp.eq.s32.totalorder %s11, 3
    %p96 = por %p94, %p95
    %p97 = scmp.ne.s32.totalorder %s89, %s92
    %p98 = scmp.eq.s32.totalorder %s11, 0
    %p99 = por %p97, %p98
    %p100 = scmp.ne.s32.totalorder %s89, %s92
    %p101 = scmp.eq.s32.totalorder %s16, 3
    %p102 = por %p100, %p101
    %p103 = scmp.ne.s32.totalorder %s92, %s93
    %p104 = scmp.eq.s32.totalorder %s16, 0
    %p105 = por %p103, %p104
    %p106 = scmp.ne.s32.totalorder %s92, %s93
    %p107 = scmp.eq.s32.totalorder %s17, 3
    %p108 = por %p106, %p107
    %p110 = scmp.ne.s32.totalorder %s93, %s109
    %p111 = scmp.eq.s32.totalorder %s17, 0
    %p112 = por %p110, %p111
    %p113 = scmp.le.s32.totalorder 1, %s11
    %p114 = scmp.lt.s32.totalorder %s11, 5
    %p115 = pnand %p113, %p114
    %p116 = pneg %p115
    // Predicated region
    $region9: #{tpu_custom_call.1} parent=5 // pred_check
      _
    $region10: #{tpu_custom_call.1} parent=5 // pred_check_branch
      %118 = sbr.rel (%p115) target = $region12
    $region11: #{tpu_custom_call.1} parent=5 // pred_region
      %s119 = ssub.s32 %s11, 1
      // Predicated region
      $region13: #{tpu_custom_call.1} parent=11 // pred_check
        %p120 = pneg %p58
      $region14: #{tpu_custom_call.1} parent=11 // pred_check_branch
        %122 = sbr.rel (%p120) target = $region16
      $region15: #{tpu_custom_call.1} parent=11 // pred_region
        _
      $region16: #{tpu_custom_call.1} parent=11 // pred_fallthru
        _
      // Predicated region
      $region17: #{tpu_custom_call.1} parent=11 // pred_check
        %p123 = pneg %p79
      $region18: #{tpu_custom_call.1} parent=11 // pred_check_branch
        %125 = sbr.rel (%p123) target = $region20
      $region19: #{tpu_custom_call.1} parent=11 // pred_region
        _
      $region20: #{tpu_custom_call.1} parent=11 // pred_fallthru
        _
    $region12: #{tpu_custom_call.1} parent=5 // pred_fallthru
      _
    %p126 = scmp.lt.s32.totalorder %s11, 4
    // Predicated region
    $region21: #{tpu_custom_call.1} parent=5 // pred_check
      %p127 = pneg %p126
    $region22: #{tpu_custom_call.1} parent=5 // pred_check_branch
      %129 = sbr.rel (%p127) target = $region24
    $region23: #{tpu_custom_call.1} parent=5 // pred_region
      // Predicated region
      $region25: #{tpu_custom_call.1} parent=23 // pred_check
        %p130 = pneg %p31
      $region26: #{tpu_custom_call.1} parent=23 // pred_check_branch
        %132 = sbr.rel (%p130) target = $region28
      $region27: #{tpu_custom_call.1} parent=23 // pred_region
        %s133 = smul.u32 2, %s11
        %p134 = scmp.lt.s32.totalorder %s133, 7
        %s135 = scalar_select %p134, %s133, 7
        %s136 = smul.addr %s135, 8
        %s137 = scalar_lea.vmem %s0, %s136
        %s138 = smul.u32 2, %s11
      $region28: #{tpu_custom_call.1} parent=23 // pred_fallthru
        _
    $region24: #{tpu_custom_call.1} parent=5 // pred_fallthru
      _
    %p139 = scmp.le.s32.totalorder 1, %s11
    %p140 = scmp.lt.s32.totalorder %s11, 5
    %p141 = pnand %p139, %p140
    %p142 = pneg %p141
    // Predicated region
    $region29: #{tpu_custom_call.1} parent=5 // pred_check
      _
    $region30: #{tpu_custom_call.1} parent=5 // pred_check_branch
      %144 = sbr.rel (%p141) target = $region32
    $region31: #{tpu_custom_call.1} parent=5 // pred_region
      %s145 = ssub.s32 %s11, 1
      %s146 = smul.u32 2, %s16
      %p147 = scmp.lt.s32.totalorder %s146, 7
      %s148 = scalar_select %p147, %s146, 7
      %s149 = smul.addr %s148, 8
      %s150 = scalar_lea.vmem %s0, %s149
      %p151 = pneg %p37
      %p152 = pneg %p34
      %p153 = pneg %p58
      %p154 = pneg %p55
      %p155 = pneg %p79
      %p156 = pneg %p76
      %p157 = pneg %p105
      %p158 = pneg %p102
      %s159 = smul.u32 2, %s16
      %p160 = scmp.lt.s32.totalorder %s159, 7
      %s161 = scalar_select %p160, %s159, 7
      %s162 = smul.addr %s161, 8
      %s163 = scalar_lea.vmem %s3, %s162
      %s164 = smul.u32 2, %s16
      %p165 = scmp.lt.s32.totalorder %s164, 7
      %s166 = scalar_select %p165, %s164, 7
      %s167 = smul.addr %s166, 8
      %s168 = scalar_lea.vmem %s0, %s167
      %s169 = smul.u32 2, %s16
      %s170 = smul.u32 2, %s16
      %p171 = scmp.lt.s32.totalorder %s170, 7
      %s172 = scalar_select %p171, %s170, 7
      %s173 = smul.addr %s172, 8
      %s174 = scalar_lea.vmem %s3, %s173
      %s175 = smul.u32 2, %s16
      %v176 = vld [vmem:[%s168] sm:$0xff]
      %v177 = vld [vmem:[%s168 + $0x8] sm:$0xff]
      %v178 = vld [vmem:[%s1] sm:$0xff]
      %v179 = vld [vmem:[%s1 + $0x8] sm:$0xff]
      %v180 = vld [vmem:[%s1 + $0x10] sm:$0xff]
      %v181 = vld [vmem:[%s1 + $0x18] sm:$0xff]
      %v182 = vld [vmem:[#allocation2] sm:$0x1]
      %v184 = vperm.slane %v182, 0
      %vm186 = vcmask 261120
      %v188 = vsel %vm186, %v176, 0
      %v191 = vsel %vm186, %v177, 0
      %193 = vmatpush.msra.mxu0 0.0
      %194 = vmatpush.msra.mxu0 0.0
      %195 = vmatpush.msra.mxu0 0.0
      %196 = vmatpush.msra.mxu0 0.0
      %197 = vmatpush.msra.mxu0 0.0
      %198 = vmatpush.msra.mxu0 0.0
      %199 = vmatpush.msra.mxu0 0.0
      %200 = vmatpush.msra.mxu0 0.0
      %201 = vmatpush.msra.mxu0 0.0
      %202 = vmatpush.msra.mxu0 0.0
      %203 = vmatpush.msra.mxu0 0.0
      %204 = vmatpush.msra.mxu0 0.0
      %205 = vmatpush.msra.mxu0 %v181
      %206 = vmatpush.msra.mxu0 %v180
      %207 = vmatpush.msra.mxu0 %v179
      %208 = vmatpush.msra.mxu0 %v178
      %209 = vmatmul.f32.gmra.mxu0 %v188
      %v210 = vpop.f32.mrf.mxu0
      %v211 = vadd.f32 %v184, %v210
      %212 = vmatmul.f32.gmra.mxu0 %v191
      %v213 = vpop.f32.mrf.mxu0
      %v214 = vadd.f32 %v184, %v213
      %215 = vdwg.mxu0
      %vm216 = vcmask 7168
      %217 = vst.msk [vmem:[%s174] sm:$0xff] %vm216, %v211
      %218 = vst.msk [vmem:[%s174 + $0x8] sm:$0xff] %vm216, %v214
      %s219 = smul.u32 2, %s16
      %p220 = scmp.lt.s32.totalorder %s219, 7
      %s221 = scalar_select %p220, %s219, 7
      %s222 = smul.addr %s221, 8
      %s223 = scalar_lea.vmem %s3, %s222
      // Predicated region
      $region33: #{tpu_custom_call.1} parent=31 // pred_check
        %p224 = pneg %p102
      $region34: #{tpu_custom_call.1} parent=31 // pred_check_branch
        %226 = sbr.rel (%p224) target = $region36
      $region35: #{tpu_custom_call.1} parent=31 // pred_region
        %s227 = smul.u32 2, %s16
      $region36: #{tpu_custom_call.1} parent=31 // pred_fallthru
        _
    $region32: #{tpu_custom_call.1} parent=5 // pred_fallthru
      _
    %p228 = scmp.le.s32.totalorder 2, %s11
    // Predicated region
    $region37: #{tpu_custom_call.1} parent=5 // pred_check
      %p229 = pneg %p228
    $region38: #{tpu_custom_call.1} parent=5 // pred_check_branch
      %231 = sbr.rel (%p229) target = $region40
    $region39: #{tpu_custom_call.1} parent=5 // pred_region
      %s232 = ssub.s32 %s11, 2
      // Predicated region
      $region41: #{tpu_custom_call.1} parent=39 // pred_check
        %p233 = pneg %p108
      $region42: #{tpu_custom_call.1} parent=39 // pred_check_branch
        %235 = sbr.rel (%p233) target = $region44
      $region43: #{tpu_custom_call.1} parent=39 // pred_region
        %s236 = smul.u32 2, %s17
        %p237 = scmp.lt.s32.totalorder %s236, 7
        %s238 = scalar_select %p237, %s236, 7
        %s239 = smul.addr %s238, 8
        %s240 = scalar_lea.vmem %s3, %s239
      $region44: #{tpu_custom_call.1} parent=39 // pred_fallthru
        _
    $region40: #{tpu_custom_call.1} parent=5 // pred_fallthru
      _
  $region6: #{tpu_custom_call.1} parent=0 // loop_footer
    %s15 = sadd.s32 1, %s11
  $region7: #{tpu_custom_call.1} parent=0 // loop_footer_branch
    %10 = sbr.rel target = $region3
  $region8: #{tpu_custom_call.1} parent=0 // loop_exit
    _

</llo_original>
